<compile_context>
chip_gen: v6e
topology: v6e:2x2x1
jax: 0.10.0
libtpu: 0.0.40
codegen_flags: <defaults>
</compile_context>

<pallas_src>
import functools

import jax
import jax.numpy as jnp
from jax import lax
from jax.experimental import pallas as pl
from jax.experimental.pallas import tpu as pltpu


def _round_up(x, m):
    return (x + m - 1) // m * m


def _vmem_capacity_bytes():
    """Physical VMEM per TensorCore; conservative default (v7x = 64 MiB)."""
    try:
        info = pltpu.get_tpu_info()
        for attr in ("vmem_capacity_bytes", "vmem_bytes", "vmem_size_bytes",
                     "vmem_capacity"):
            v = getattr(info, attr, None)
            if v:
                return int(v)
    except Exception:
        pass
    return 64 * 1024 * 1024


def _conv1d_block_kernel(x_ref, w_ref, params_ref, gmat_ref, o_ref, *,
                         k, t_out, n_groups, use_im2col):
    """One block of Bb batch samples per grid step.

    x_ref      : (Bb, t_a + K - 1, C_in)   zero-padded channels-last input
    w_ref      : (K, C_in, C_out)          per-tap conv weights
    params_ref : (3, C_out)                rows = [bias, gamma, beta]
    gmat_ref   : (C_out, n_groups)         one-hot group membership (f32)
    o_ref      : (Bb, t_a, C_out)          channels-last output (lane = C_out)
    """
    bb, _, c_in = x_ref.shape
    t_a = o_ref.shape[1]          # multiple of 8 (wrapper guarantees it)
    c_out = o_ref.shape[2]

    x = x_ref[...]                # (Bb, t_a + K - 1, C_in)

    # ---- Conv1d (bias-free accumulator, f32) -------------------------------
    if use_im2col:
        cols = [x[:, dk:dk + t_a, :] for dk in range(k)]
        xcol = cols[0] if k == 1 else jnp.concatenate(cols, axis=-1)
        lhs = xcol.reshape(bb * t_a, k * c_in)
        acc = jnp.dot(lhs, w_ref[...].reshape(k * c_in, c_out),
                      preferred_element_type=jnp.float32)
    else:
        acc = None
        for dk in range(k):                      # k is small & static
            lhs = x[:, dk:dk + t_a, :].reshape(bb * t_a, c_in)
            part = jnp.dot(lhs, w_ref[dk],
                           preferred_element_type=jnp.float32)
            acc = part if acc is None else acc + part
    acc = acc.reshape(bb, t_a, c_out)            # layout-preserving (t_a % 8 == 0)

    # ---- GroupNorm statistics: one pass, bias folded analytically ----------
    bvec = params_ref[0:1, :].astype(jnp.float32)    # (1, C_out)
    gamma = params_ref[1:2, :].astype(jnp.float32)
    beta = params_ref[2:3, :].astype(jnp.float32)

    if t_a != t_out:
        tmask = lax.broadcasted_iota(jnp.int32, (1, t_a, 1), 1) < t_out
        acc_m = jnp.where(tmask, acc, 0.0)
    else:
        acc_m = acc
    s = jnp.sum(acc_m, axis=1)                       # (Bb, C_out)
    ss = jnp.sum(acc_m * acc_m, axis=1)              # (Bb, C_out)

    # sums of y = acc + bias, corrected per-channel (O(Bb*C_out) work)
    s_y = s + float(t_out) * bvec
    ss_y = ss + 2.0 * bvec * s + float(t_out) * (bvec * bvec)

    G = gmat_ref[...]                                # (C_out, n_groups)
    cg = c_out // n_groups
    count = float(t_out * cg)

    stats = jnp.concatenate([s_y, ss_y], axis=0)     # (2*Bb, C_out)
    stats_g = lax.dot_general(stats, G, (((1,), (0,)), ((), ())),
                              preferred_element_type=jnp.float32)
    mean_g = stats_g[:bb] / count                    # (Bb, n_groups)
    var_g = stats_g[bb:] / count - mean_g * mean_g
    rstd_g = lax.rsqrt(var_g + 1e-5)

    bcast = jnp.concatenate([mean_g, rstd_g], axis=0)    # (2*Bb, n_groups)
    bcast_c = lax.dot_general(bcast, G, (((1,), (1,)), ((), ())),
                              preferred_element_type=jnp.float32)
    mean_c = bcast_c[:bb]                            # (Bb, C_out)
    rstd_c = bcast_c[bb:]                            # (Bb, C_out)

    scale = rstd_c * gamma                           # (Bb, C_out)
    shift = beta + (bvec - mean_c) * scale           # (Bb, C_out)
    y = acc * scale[:, None, :] + shift[:, None, :]  # (Bb, t_a, C_out)

    # ---- Mish: one exp, divide offloaded to the EUP ------------------------
    # tanh(softplus(y)) = u(u+2)/(u(u+2)+2), u = exp(y); clamp keeps f32 finite
    # (for y > 20 the factor is 1.0 to f32 precision anyway).
    u = jnp.exp(jnp.minimum(y, 20.0))
    num = u * (u + 2.0)
    mish = y * num * pl.reciprocal(num + 2.0, approx=False)

    # ---- single lane-dense channels-last store ------------------------------
    o_ref[...] = mish.astype(o_ref.dtype)


def conv1d_block(x, w, b, gamma, beta, *, n_groups=8, block_b=None,
                 mxu_bf16=False):
    """x: (B, C_in, T) NCL (PyTorch layout).  Returns (B, C_out, T_out) NCL.

    mxu_bf16: optional bf16 MXU operands (v6e/v7x); off by default so the
    1e-4 tolerance against the f32 reference always holds.
    """
    B, C_in, T = x.shape
    C_out, C_in_w, K = w.shape
    assert C_in_w == C_in
    assert C_out % n_groups == 0
    pad = K // 2
    t_out = T + 2 * pad - (K - 1)
    t_a = _round_up(t_out, 8)               # sublane-aligned output length
    t_in_total = t_a + (K - 1)              # padded input length per sample

    # -- channels-last + ALL time padding done once here (conv pad + align) --
    x_cl = jnp.transpose(x, (0, 2, 1))                          # (B, T, C_in)
    right = t_in_total - pad - T
    x_in = jnp.pad(x_cl, ((0, 0), (pad, right), (0, 0)))

    w_taps = jnp.transpose(w, (2, 1, 0))                        # (K, C_in, C_out)
    params = jnp.stack([b, gamma, beta], axis=0)                # (3, C_out)
    gmat = (jnp.arange(C_out)[:, None] // (C_out // n_groups) ==
            jnp.arange(n_groups)[None, :]).astype(jnp.float32)  # (C_out, G)

    if mxu_bf16:
        x_in = x_in.astype(jnp.bfloat16)
        w_taps = w_taps.astype(jnp.bfloat16)

    use_im2col = (K * C_in) >= 128

    # -- padding-aware VMEM accounting & block_b selection --------------------
    in_isz = jnp.dtype(x_in.dtype).itemsize
    w_isz = jnp.dtype(w_taps.dtype).itemsize
    out_isz = jnp.dtype(x.dtype).itemsize
    lane, sub = 128, 8
    cip = _round_up(C_in, lane)
    cop = _round_up(C_out, lane)

    def est(bb):
        x_blk = bb * _round_up(t_in_total, sub) * cip * in_isz
        o_blk = bb * t_a * cop * out_isz
        w_blk = K * _round_up(C_in, sub) * cop * w_isz
        p_blk = sub * cop * 4
        g_blk = _round_up(C_out, sub) * _round_up(n_groups, lane) * 4
        tmp = 4 * bb * t_a * cop * 4        # acc / y / u / num live f32 slabs
        if use_im2col:
            tmp += bb * t_a * _round_up(K * C_in, lane) * 4
        return 2 * (x_blk + o_blk) + 2 * (w_blk + p_blk + g_blk) + tmp

    cap = _vmem_capacity_bytes()
    budget = int(cap * 0.4)

    if block_b is None:
        divisors = [d for d in range(1, B + 1) if B % d == 0]
        target_bb = max(1, min(64, 512 // max(1, t_a)))
        feasible = [d for d in divisors if est(d) <= budget]
        if not feasible:
            feasible = [1]
        cands = [d for d in feasible if d <= target_bb] or [min(feasible)]
        even = [d for d in cands if (B // d) >= 2 and (B // d) % 2 == 0]
        multi = [d for d in cands if (B // d) >= 2]
        block_b = max(even) if even else (max(multi) if multi else max(cands))
    n_steps = B // block_b

    need = est(block_b)
    frac = 0.625 if cap <= 64 * 1024 * 1024 else 0.75
    vmem_limit = int(min(int(cap * frac),
                         max(32 * 1024 * 1024, int(1.5 * need))))

    out_cl = pl.pallas_call(
        functools.partial(_conv1d_block_kernel,
                          k=K, t_out=t_out, n_groups=n_groups,
                          use_im2col=use_im2col),
        out_shape=jax.ShapeDtypeStruct((B, t_a, C_out), x.dtype),
        grid=(n_steps,),
        in_specs=[
            pl.BlockSpec((block_b, t_in_total, C_in), lambda i: (i, 0, 0)),
            pl.BlockSpec((K, C_in, C_out), lambda i: (0, 0, 0)),
            pl.BlockSpec((3, C_out), lambda i: (0, 0)),
            pl.BlockSpec((C_out, n_groups), lambda i: (0, 0)),
        ],
        out_specs=pl.BlockSpec((block_b, t_a, C_out), lambda i: (i, 0, 0)),
        compiler_params=pltpu.CompilerParams(
            dimension_semantics=("parallel",),
            vmem_limit_bytes=vmem_limit),
    )(x_in, w_taps, params, gmat)

    # NCL layout for the PyTorch-compatible result (fused by XLA downstream).
    return jnp.transpose(out_cl[:, :t_out, :], (0, 2, 1))


def _reference(x, w, b, gamma, beta, n_groups):
    """Pure-JAX reference matching PyTorch Conv1d+GroupNorm+Mish semantics."""
    K = w.shape[-1]
    pad = K // 2
    y = lax.conv_general_dilated(
        x, w, window_strides=(1,), padding=[(pad, pad)],
        dimension_numbers=("NCH", "OIH", "NCH"))
    y = y + b[None, :, None]
    B, C, T = y.shape
    yg = y.reshape(B, n_groups, C // n_groups, T)
    mean = yg.mean(axis=(2, 3), keepdims=True)
    var = ((yg - mean) ** 2).mean(axis=(2, 3), keepdims=True)
    yn = ((yg - mean) / jnp.sqrt(var + 1e-5)).reshape(B, C, T)
    yn = yn * gamma[None, :, None] + beta[None, :, None]
    sp = jnp.logaddexp(yn, 0.0)
    return yn * jnp.tanh(sp)


if __name__ == "__main__":
    B, C_in, C_out, T, K, n_groups = 2, 4, 16, 16, 3, 8

    key = jax.random.PRNGKey(0)
    kx, kw, kb, kg, kbeta = jax.random.split(key, 5)
    x = jax.random.normal(kx, (B, C_in, T), dtype=jnp.float32)
    w = jax.random.normal(kw, (C_out, C_in, K), dtype=jnp.float32) * 0.2
    b = jax.random.normal(kb, (C_out,), dtype=jnp.float32) * 0.1
    gamma = 1.0 + 0.1 * jax.random.normal(kg, (C_out,), dtype=jnp.float32)
    beta = 0.1 * jax.random.normal(kbeta, (C_out,), dtype=jnp.float32)

    out = conv1d_block(x, w, b, gamma, beta, n_groups=n_groups)
    out = jax.block_until_ready(out)

    ref = _reference(x, w, b, gamma, beta, n_groups)
    assert out.shape == (B, C_out, T), out.shape
    assert jnp.allclose(out, ref, rtol=1e-4, atol=1e-4), (
        float(jnp.max(jnp.abs(out - ref))))
    print("KERNEL_OK")
</pallas_src>

<mosaic_0001>
module attributes {stable_mosaic.version = 11 : i64} {
  func.func @_conv1d_block_kernel(%arg0: i32, %arg1: memref<1x18x4xf32, #tpu.memory_space<vmem>>, %arg2: memref<3x4x16xf32, #tpu.memory_space<vmem>>, %arg3: memref<3x16xf32, #tpu.memory_space<vmem>>, %arg4: memref<16x8xf32, #tpu.memory_space<vmem>>, %arg5: memref<1x16x16xf32, #tpu.memory_space<vmem>>) attributes {dimension_semantics = [#tpu.dimension_semantics<parallel>], iteration_bounds = array<i64: 2>, scalar_prefetch = 0 : i64, scratch_operands = 0 : i64, tpu.core_type = #tpu.core_type<tc>, window_params = [{transform_indices = @transform_0, window_bounds = array<i64: 1, 18, 4>}, {pipeline_mode = #tpu.pipeline_mode<synchronous>, transform_indices = @transform_1, window_bounds = array<i64: 3, 4, 16>}, {pipeline_mode = #tpu.pipeline_mode<synchronous>, transform_indices = @transform_2, window_bounds = array<i64: 3, 16>}, {pipeline_mode = #tpu.pipeline_mode<synchronous>, transform_indices = @transform_3, window_bounds = array<i64: 16, 8>}, {transform_indices = @transform_4, window_bounds = array<i64: 1, 16, 16>}]} {
    %c0 = arith.constant 0 : index
    %c0_0 = arith.constant 0 : index
    %c0_1 = arith.constant 0 : index
    %0 = vector.load %arg1[%c0, %c0_0, %c0_1] : memref<1x18x4xf32, #tpu.memory_space<vmem>>, vector<1x18x4xf32>
    %1 = vector.extract_strided_slice %0 {offsets = [0, 0, 0], sizes = [1, 16, 4], strides = [1, 1, 1]} : vector<1x18x4xf32> to vector<1x16x4xf32>
    %2 = vector.shape_cast %1 : vector<1x16x4xf32> to vector<16x4xf32>
    %c0_2 = arith.constant 0 : index
    %c0_3 = arith.constant 0 : index
    %c0_4 = arith.constant 0 : index
    %3 = vector.load %arg2[%c0_2, %c0_3, %c0_4] : memref<3x4x16xf32, #tpu.memory_space<vmem>>, vector<1x4x16xf32>
    %4 = vector.shape_cast %3 : vector<1x4x16xf32> to vector<4x16xf32>
    %cst = arith.constant dense<0.000000e+00> : vector<16x16xf32>
    %5 = tpu.matmul %2, %4, %cst {dimension_numbers = #tpu.dot_dimension_numbers<[1], [0], [0], [1], [0, 0, 1, 1], [], []>} : vector<16x4xf32>, vector<4x16xf32>, vector<16x16xf32> -> vector<16x16xf32>
    %6 = vector.extract_strided_slice %0 {offsets = [0, 1, 0], sizes = [1, 16, 4], strides = [1, 1, 1]} : vector<1x18x4xf32> to vector<1x16x4xf32>
    %7 = vector.shape_cast %6 : vector<1x16x4xf32> to vector<16x4xf32>
    %c1 = arith.constant 1 : index
    %c0_5 = arith.constant 0 : index
    %c0_6 = arith.constant 0 : index
    %8 = vector.load %arg2[%c1, %c0_5, %c0_6] : memref<3x4x16xf32, #tpu.memory_space<vmem>>, vector<1x4x16xf32>
    %9 = vector.shape_cast %8 : vector<1x4x16xf32> to vector<4x16xf32>
    %cst_7 = arith.constant dense<0.000000e+00> : vector<16x16xf32>
    %10 = tpu.matmul %7, %9, %cst_7 {dimension_numbers = #tpu.dot_dimension_numbers<[1], [0], [0], [1], [0, 0, 1, 1], [], []>} : vector<16x4xf32>, vector<4x16xf32>, vector<16x16xf32> -> vector<16x16xf32>
    %11 = arith.addf %5, %10 : vector<16x16xf32>
    %12 = vector.extract_strided_slice %0 {offsets = [0, 2, 0], sizes = [1, 16, 4], strides = [1, 1, 1]} : vector<1x18x4xf32> to vector<1x16x4xf32>
    %13 = vector.shape_cast %12 : vector<1x16x4xf32> to vector<16x4xf32>
    %c2 = arith.constant 2 : index
    %c0_8 = arith.constant 0 : index
    %c0_9 = arith.constant 0 : index
    %14 = vector.load %arg2[%c2, %c0_8, %c0_9] : memref<3x4x16xf32, #tpu.memory_space<vmem>>, vector<1x4x16xf32>
    %15 = vector.shape_cast %14 : vector<1x4x16xf32> to vector<4x16xf32>
    %cst_10 = arith.constant dense<0.000000e+00> : vector<16x16xf32>
    %16 = tpu.matmul %13, %15, %cst_10 {dimension_numbers = #tpu.dot_dimension_numbers<[1], [0], [0], [1], [0, 0, 1, 1], [], []>} : vector<16x4xf32>, vector<4x16xf32>, vector<16x16xf32> -> vector<16x16xf32>
    %17 = arith.addf %11, %16 : vector<16x16xf32>
    %18 = vector.shape_cast %17 : vector<16x16xf32> to vector<1x16x16xf32>
    %c0_11 = arith.constant 0 : index
    %c0_12 = arith.constant 0 : index
    %19 = vector.load %arg3[%c0_11, %c0_12] : memref<3x16xf32, #tpu.memory_space<vmem>>, vector<1x16xf32>
    %c1_13 = arith.constant 1 : index
    %c0_14 = arith.constant 0 : index
    %20 = vector.load %arg3[%c1_13, %c0_14] : memref<3x16xf32, #tpu.memory_space<vmem>>, vector<1x16xf32>
    %c2_15 = arith.constant 2 : index
    %c0_16 = arith.constant 0 : index
    %21 = vector.load %arg3[%c2_15, %c0_16] : memref<3x16xf32, #tpu.memory_space<vmem>>, vector<1x16xf32>
    %cst_17 = arith.constant dense<0.000000e+00> : vector<1x16xf32>
    %22 = vector.multi_reduction <add>, %18, %cst_17 [1] : vector<1x16x16xf32> to vector<1x16xf32>
    %23 = arith.mulf %18, %18 : vector<1x16x16xf32>
    %cst_18 = arith.constant dense<0.000000e+00> : vector<1x16xf32>
    %24 = vector.multi_reduction <add>, %23, %cst_18 [1] : vector<1x16x16xf32> to vector<1x16xf32>
    %cst_19 = arith.constant 1.600000e+01 : f32
    %25 = vector.broadcast %cst_19 : f32 to vector<1x16xf32>
    %26 = arith.mulf %25, %19 : vector<1x16xf32>
    %27 = arith.addf %22, %26 : vector<1x16xf32>
    %cst_20 = arith.constant 2.000000e+00 : f32
    %28 = vector.broadcast %cst_20 : f32 to vector<1x16xf32>
    %29 = arith.mulf %28, %19 : vector<1x16xf32>
    %30 = arith.mulf %29, %22 : vector<1x16xf32>
    %31 = arith.addf %24, %30 : vector<1x16xf32>
    %32 = arith.mulf %19, %19 : vector<1x16xf32>
    %cst_21 = arith.constant 1.600000e+01 : f32
    %33 = vector.broadcast %cst_21 : f32 to vector<1x16xf32>
    %34 = arith.mulf %33, %32 : vector<1x16xf32>
    %35 = arith.addf %31, %34 : vector<1x16xf32>
    %c0_22 = arith.constant 0 : index
    %c0_23 = arith.constant 0 : index
    %36 = vector.load %arg4[%c0_22, %c0_23] : memref<16x8xf32, #tpu.memory_space<vmem>>, vector<16x8xf32>
    %37 = tpu.concatenate %27, %35 in 0 : vector<1x16xf32>, vector<1x16xf32> -> vector<2x16xf32>
    %cst_24 = arith.constant dense<0.000000e+00> : vector<2x8xf32>
    %38 = tpu.matmul %37, %36, %cst_24 {dimension_numbers = #tpu.dot_dimension_numbers<[1], [0], [0], [1], [0, 0, 1, 1], [], []>} : vector<2x16xf32>, vector<16x8xf32>, vector<2x8xf32> -> vector<2x8xf32>
    %39 = vector.extract_strided_slice %38 {offsets = [0, 0], sizes = [1, 8], strides = [1, 1]} : vector<2x8xf32> to vector<1x8xf32>
    %cst_25 = arith.constant 3.200000e+01 : f32
    %40 = vector.broadcast %cst_25 : f32 to vector<1x8xf32>
    %41 = arith.divf %39, %40 : vector<1x8xf32>
    %42 = vector.extract_strided_slice %38 {offsets = [1, 0], sizes = [1, 8], strides = [1, 1]} : vector<2x8xf32> to vector<1x8xf32>
    %cst_26 = arith.constant 3.200000e+01 : f32
    %43 = vector.broadcast %cst_26 : f32 to vector<1x8xf32>
    %44 = arith.divf %42, %43 : vector<1x8xf32>
    %45 = arith.mulf %41, %41 : vector<1x8xf32>
    %46 = arith.subf %44, %45 : vector<1x8xf32>
    %cst_27 = arith.constant 9.99999974E-6 : f32
    %47 = vector.broadcast %cst_27 : f32 to vector<1x8xf32>
    %48 = arith.addf %46, %47 : vector<1x8xf32>
    %49 = math.rsqrt %48 : vector<1x8xf32>
    %50 = tpu.concatenate %41, %49 in 0 : vector<1x8xf32>, vector<1x8xf32> -> vector<2x8xf32>
    %cst_28 = arith.constant dense<0.000000e+00> : vector<2x16xf32>
    %51 = tpu.matmul %50, %36, %cst_28 {dimension_numbers = #tpu.dot_dimension_numbers<[1], [1], [0], [0], [0, 0, 1, 0], [], []>} : vector<2x8xf32>, vector<16x8xf32>, vector<2x16xf32> -> vector<2x16xf32>
    %52 = vector.extract_strided_slice %51 {offsets = [0, 0], sizes = [1, 16], strides = [1, 1]} : vector<2x16xf32> to vector<1x16xf32>
    %53 = vector.extract_strided_slice %51 {offsets = [1, 0], sizes = [1, 16], strides = [1, 1]} : vector<2x16xf32> to vector<1x16xf32>
    %54 = arith.mulf %53, %20 : vector<1x16xf32>
    %55 = arith.subf %19, %52 : vector<1x16xf32>
    %56 = arith.mulf %55, %54 : vector<1x16xf32>
    %57 = arith.addf %21, %56 : vector<1x16xf32>
    %58 = vector.shape_cast %54 : vector<1x16xf32> to vector<1x1x16xf32>
    %59 = vector.broadcast %58 : vector<1x1x16xf32> to vector<1x16x16xf32>
    %60 = arith.mulf %18, %59 : vector<1x16x16xf32>
    %61 = vector.shape_cast %57 : vector<1x16xf32> to vector<1x1x16xf32>
    %62 = vector.broadcast %61 : vector<1x1x16xf32> to vector<1x16x16xf32>
    %63 = arith.addf %60, %62 : vector<1x16x16xf32>
    %cst_29 = arith.constant 2.000000e+01 : f32
    %64 = vector.broadcast %cst_29 : f32 to vector<1x16x16xf32>
    %65 = arith.minimumf %63, %64 : vector<1x16x16xf32>
    %66 = math.exp %65 : vector<1x16x16xf32>
    %cst_30 = arith.constant 2.000000e+00 : f32
    %67 = vector.broadcast %cst_30 : f32 to vector<1x16x16xf32>
    %68 = arith.addf %66, %67 : vector<1x16x16xf32>
    %69 = arith.mulf %66, %68 : vector<1x16x16xf32>
    %70 = arith.mulf %63, %69 : vector<1x16x16xf32>
    %cst_31 = arith.constant 2.000000e+00 : f32
    %71 = vector.broadcast %cst_31 : f32 to vector<1x16x16xf32>
    %72 = arith.addf %69, %71 : vector<1x16x16xf32>
    %73 = tpu.reciprocal %72 : vector<1x16x16xf32> -> vector<1x16x16xf32>
    %74 = arith.mulf %70, %73 : vector<1x16x16xf32>
    %c0_32 = arith.constant 0 : index
    %c0_33 = arith.constant 0 : index
    %c0_34 = arith.constant 0 : index
    %75 = vector.load %arg5[%c0_32, %c0_33, %c0_34] : memref<1x16x16xf32, #tpu.memory_space<vmem>>, vector<1x16x16xf32>
    tpu.vector_store %arg5[%c0_32, %c0_33, %c0_34], %74 {strides = array<i32>} : memref<1x16x16xf32, #tpu.memory_space<vmem>>, vector<1x16x16xf32>,
    return
  }
  func.func @transform_0(%arg0: i32) -> (i32, i32, i32) {
    %c0_i32 = arith.constant 0 : i32
    %c0_i32_0 = arith.constant 0 : i32
    %c0_i32_1 = arith.constant 0 : i32
    return %arg0, %c0_i32, %c0_i32_0 : i32, i32, i32
  }
  func.func @transform_1(%arg0: i32) -> (i32, i32, i32) {
    %c0_i32 = arith.constant 0 : i32
    %c0_i32_0 = arith.constant 0 : i32
    %c0_i32_1 = arith.constant 0 : i32
    %c0_i32_2 = arith.constant 0 : i32
    return %c0_i32, %c0_i32_0, %c0_i32_1 : i32, i32, i32
  }
  func.func @transform_2(%arg0: i32) -> (i32, i32) {
    %c0_i32 = arith.constant 0 : i32
    %c0_i32_0 = arith.constant 0 : i32
    %c0_i32_1 = arith.constant 0 : i32
    return %c0_i32, %c0_i32_0 : i32, i32
  }
  func.func @transform_3(%arg0: i32) -> (i32, i32) {
    %c0_i32 = arith.constant 0 : i32
    %c0_i32_0 = arith.constant 0 : i32
    %c0_i32_1 = arith.constant 0 : i32
    return %c0_i32, %c0_i32_0 : i32, i32
  }
  func.func @transform_4(%arg0: i32) -> (i32, i32, i32) {
    %c0_i32 = arith.constant 0 : i32
    %c0_i32_0 = arith.constant 0 : i32
    %c0_i32_1 = arith.constant 0 : i32
    return %arg0, %c0_i32, %c0_i32_0 : i32, i32, i32
  }
}

</mosaic_0001>

<llo_original>
// kernel: tpu_custom_call.1
$region0: #{tpu_custom_call.1}
  #allocation0 [shape = 'u32[]', space=smem, size = 0x4, offset = 0x4, fixed_abs, tag = 'smem constant byte address 0x4 - core index']
  #allocation1 [shape = 'u32[144,128]{1,0:T(1,128)}', space=vmem, size = 0x12000, scoped, tag = 'internal scratch']
  %s0 = inlined_call_operand.vmem [shape: f32[2,18,4], index: 0, kind: input, shape index: {}]
  %s1 = inlined_call_operand.vmem [shape: f32[3,4,16], index: 1, kind: input, shape index: {}]
  %s2 = inlined_call_operand.vmem [shape: f32[3,16], index: 2, kind: input, shape index: {}]
  %s3 = inlined_call_operand.vmem [shape: f32[16,8], index: 3, kind: input, shape index: {}]
  %s4 = inlined_call_operand.hbm [shape: f32[2,16,16], index: 4, kind: output, shape index: {}]
  %s5 = sld [smem:[#allocation0]]
  $region49: #{tpu_custom_call.1} parent=0
    _
  %s7 = ssub.s32 1, %s5
  %s8 = scalar_select 0, %s7, %s5
  $region1: #{tpu_custom_call.1} parent=0
    #allocation2 [shape = 'u8[16384]{0}', space=vmem, size = 0x4000, scoped, tag = 'output window, operand 0']
    #allocation3 [shape = 's32[2]{0}', space=sflag, size = 0x8, scoped, tag = 'scoped memory for tpu_custom_call.1']
    %9 = vsyncpa [#allocation3], 0
    %s10 = scalar_lea.sflag [#allocation3], 1
    %11 = vsyncpa %s10, 0
    loop: start=0, step=1, limit=4
    $region2: #{tpu_custom_call.1} parent=1 // loop_pre_header
      _
    $region3: #{tpu_custom_call.1} parent=1 // loop_header
      %s13 = sphi 0, %s17
      %p14 = scmp.ge.s32.totalorder %s13, 4
      %s23 = sphi 0, %s25
      %s26 = sphi 0, %s23
      %s27 = sphi 0, %s26
      %s43 = sphi 0, %s27
      %s47 = sphi 0, %s47
      %s49 = sphi 0, %s47
      %s50 = sphi 0, %s49
      %s64 = sphi 0, %s50
      %s68 = sphi 0, %s68
      %s70 = sphi 0, %s68
      %s71 = sphi 0, %s70
      %s85 = sphi 0, %s71
      %s89 = sphi 0, %s89
      %s91 = sphi 0, %s89
      %s92 = sphi 0, %s91
      %s106 = sphi 0, %s92
      %s112 = sphi 0, %s114
      %s115 = sphi 0, %s112
      %s116 = sphi 0, %s115
      %s132 = sphi 0, %s116
    $region4: #{tpu_custom_call.1} parent=1 // loop_header_branch
      %16 = sbr.rel (%p14) target = $region8
    $region5: #{tpu_custom_call.1} parent=1 // loop_body
      %s18 = ssub.s32 %s13, 1
      %s19 = ssub.s32 %s13, 2
      %s20 = sadd.s32 %s13, 1
      %s21 = ssub.s32 %s13, %s20
      %p22 = scmp.eq.s32.totalorder %s21, 0
      %s24 = sadd.s32 %s23, 1
      %s25 = scalar_select %p22, %s23, %s24
      %p28 = pneg %p22
      %p29 = scmp.eq.s32.totalorder %s13, 1
      %p30 = por %p28, %p29
      %p31 = scmp.ne.s32.totalorder %s23, %s26
      %p32 = scmp.eq.s32.totalorder %s13, 0
      %p33 = por %p31, %p32
      %p34 = scmp.ne.s32.totalorder %s23, %s26
      %p35 = scmp.eq.s32.totalorder %s18, 1
      %p36 = por %p34, %p35
      %p37 = scmp.ne.s32.totalorder %s26, %s27
      %p38 = scmp.eq.s32.totalorder %s18, 0
      %p39 = por %p37, %p38
      %p40 = scmp.ne.s32.totalorder %s26, %s27
      %p41 = scmp.eq.s32.totalorder %s19, 1
      %p42 = por %p40, %p41
      %p44 = scmp.ne.s32.totalorder %s27, %s43
      %p45 = scmp.eq.s32.totalorder %s19, 0
      %p46 = por %p44, %p45
      %s48 = sadd.s32 %s47, 1
      %p51 = scmp.eq.s32.totalorder %s13, 1
      %p52 = scmp.ne.s32.totalorder %s47, %s49
      %p53 = scmp.eq.s32.totalorder %s13, 0
      %p54 = por %p52, %p53
      %p55 = scmp.ne.s32.totalorder %s47, %s49
      %p56 = scmp.eq.s32.totalorder %s18, 1
      %p57 = por %p55, %p56
      %p58 = scmp.ne.s32.totalorder %s49, %s50
      %p59 = scmp.eq.s32.totalorder %s18, 0
      %p60 = por %p58, %p59
      %p61 = scmp.ne.s32.totalorder %s49, %s50
      %p62 = scmp.eq.s32.totalorder %s19, 1
      %p63 = por %p61, %p62
      %p65 = scmp.ne.s32.totalorder %s50, %s64
      %p66 = scmp.eq.s32.totalorder %s19, 0
      %p67 = por %p65, %p66
      %s69 = sadd.s32 %s68, 1
      %p72 = scmp.eq.s32.totalorder %s13, 1
      %p73 = scmp.ne.s32.totalorder %s68, %s70
      %p74 = scmp.eq.s32.totalorder %s13, 0
      %p75 = por %p73, %p74
      %p76 = scmp.ne.s32.totalorder %s68, %s70
      %p77 = scmp.eq.s32.totalorder %s18, 1
      %p78 = por %p76, %p77
      %p79 = scmp.ne.s32.totalorder %s70, %s71
      %p80 = scmp.eq.s32.totalorder %s18, 0
      %p81 = por %p79, %p80
      %p82 = scmp.ne.s32.totalorder %s70, %s71
      %p83 = scmp.eq.s32.totalorder %s19, 1
      %p84 = por %p82, %p83
      %p86 = scmp.ne.s32.totalorder %s71, %s85
      %p87 = scmp.eq.s32.totalorder %s19, 0
      %p88 = por %p86, %p87
      %s90 = sadd.s32 %s89, 1
      %p93 = scmp.eq.s32.totalorder %s13, 1
      %p94 = scmp.ne.s32.totalorder %s89, %s91
      %p95 = scmp.eq.s32.totalorder %s13, 0
      %p96 = por %p94, %p95
      %p97 = scmp.ne.s32.totalorder %s89, %s91
      %p98 = scmp.eq.s32.totalorder %s18, 1
      %p99 = por %p97, %p98
      %p100 = scmp.ne.s32.totalorder %s91, %s92
      %p101 = scmp.eq.s32.totalorder %s18, 0
      %p102 = por %p100, %p101
      %p103 = scmp.ne.s32.totalorder %s91, %s92
      %p104 = scmp.eq.s32.totalorder %s19, 1
      %p105 = por %p103, %p104
      %p107 = scmp.ne.s32.totalorder %s92, %s106
      %p108 = scmp.eq.s32.totalorder %s19, 0
      %p109 = por %p107, %p108
      %s110 = ssub.s32 %s13, %s20
      %p111 = scmp.eq.s32.totalorder %s110, 0
      %s113 = sadd.s32 %s112, 1
      %s114 = scalar_select %p111, %s112, %s113
      %p117 = pneg %p111
      %p118 = scmp.eq.s32.totalorder %s13, 1
      %p119 = por %p117, %p118
      %p120 = scmp.ne.s32.totalorder %s112, %s115
      %p121 = scmp.eq.s32.totalorder %s13, 0
      %p122 = por %p120, %p121
      %p123 = scmp.ne.s32.totalorder %s112, %s115
      %p124 = scmp.eq.s32.totalorder %s18, 1
      %p125 = por %p123, %p124
      %p126 = scmp.ne.s32.totalorder %s115, %s116
      %p127 = scmp.eq.s32.totalorder %s18, 0
      %p128 = por %p126, %p127
      %p129 = scmp.ne.s32.totalorder %s115, %s116
      %p130 = scmp.eq.s32.totalorder %s19, 1
      %p131 = por %p129, %p130
      %p133 = scmp.ne.s32.totalorder %s116, %s132
      %p134 = scmp.eq.s32.totalorder %s19, 0
      %p135 = por %p133, %p134
      %p136 = scmp.le.s32.totalorder 1, %s13
      %p137 = scmp.lt.s32.totalorder %s13, 3
      %p138 = pnand %p136, %p137
      %p139 = pneg %p138
      // Predicated region
      $region9: #{tpu_custom_call.1} parent=5 // pred_check
        _
      $region10: #{tpu_custom_call.1} parent=5 // pred_check_branch
        %141 = sbr.rel (%p138) target = $region12
      $region11: #{tpu_custom_call.1} parent=5 // pred_region
        %s142 = ssub.s32 %s13, 1
        // Predicated region
        $region13: #{tpu_custom_call.1} parent=11 // pred_check
          %p143 = pneg %p60
        $region14: #{tpu_custom_call.1} parent=11 // pred_check_branch
          %145 = sbr.rel (%p143) target = $region16
        $region15: #{tpu_custom_call.1} parent=11 // pred_region
          _
        $region16: #{tpu_custom_call.1} parent=11 // pred_fallthru
          _
        // Predicated region
        $region17: #{tpu_custom_call.1} parent=11 // pred_check
          %p146 = pneg %p81
        $region18: #{tpu_custom_call.1} parent=11 // pred_check_branch
          %148 = sbr.rel (%p146) target = $region20
        $region19: #{tpu_custom_call.1} parent=11 // pred_region
          _
        $region20: #{tpu_custom_call.1} parent=11 // pred_fallthru
          _
        // Predicated region
        $region21: #{tpu_custom_call.1} parent=11 // pred_check
          %p149 = pneg %p102
        $region22: #{tpu_custom_call.1} parent=11 // pred_check_branch
          %151 = sbr.rel (%p149) target = $region24
        $region23: #{tpu_custom_call.1} parent=11 // pred_region
          _
        $region24: #{tpu_custom_call.1} parent=11 // pred_fallthru
          _
      $region12: #{tpu_custom_call.1} parent=5 // pred_fallthru
        _
      %p152 = scmp.lt.s32.totalorder %s13, 2
      // Predicated region
      $region25: #{tpu_custom_call.1} parent=5 // pred_check
        %p153 = pneg %p152
      $region26: #{tpu_custom_call.1} parent=5 // pred_check_branch
        %155 = sbr.rel (%p153) target = $region28
      $region27: #{tpu_custom_call.1} parent=5 // pred_region
        // Predicated region
        $region29: #{tpu_custom_call.1} parent=27 // pred_check
          %p156 = pneg %p33
        $region30: #{tpu_custom_call.1} parent=27 // pred_check_branch
          %158 = sbr.rel (%p156) target = $region32
        $region31: #{tpu_custom_call.1} parent=27 // pred_region
          %p159 = scmp.lt.s32.totalorder %s13, 1
          %s160 = scalar_select %p159, %s13, 1
          %s161 = smul.addr %s160, 3
          %s162 = smul.addr %s161, 8
          %s163 = scalar_lea.vmem %s0, %s162
        $region32: #{tpu_custom_call.1} parent=27 // pred_fallthru
          _
      $region28: #{tpu_custom_call.1} parent=5 // pred_fallthru
        _
      %p164 = scmp.le.s32.totalorder 1, %s13
      %p165 = scmp.lt.s32.totalorder %s13, 3
      %p166 = pnand %p164, %p165
      %p167 = pneg %p166
      // Predicated region
      $region33: #{tpu_custom_call.1} parent=5 // pred_check
        _
      $region34: #{tpu_custom_call.1} parent=5 // pred_check_branch
        %169 = sbr.rel (%p166) target = $region36
      $region35: #{tpu_custom_call.1} parent=5 // pred_region
        %s170 = ssub.s32 %s13, 1
        %p171 = scmp.lt.s32.totalorder %s18, 1
        %s172 = scalar_select %p171, %s18, 1
        %s173 = smul.addr %s172, 3
        %s174 = smul.addr %s173, 8
        %s175 = scalar_lea.vmem %s0, %s174
        %p176 = pneg %p39
        %p177 = pneg %p36
        %p178 = pneg %p60
        %p179 = pneg %p57
        %p180 = pneg %p81
        %p181 = pneg %p78
        %p182 = pneg %p102
        %p183 = pneg %p99
        %p184 = pneg %p128
        %p185 = pneg %p125
        %s186 = sand.u32 %s115, 1
        %s187 = scalar_lea.sflag [#allocation3], %s186
        %s188 = sand.u32 %s115, 1
        %s189 = smul.addr %s188, 16
        %s190 = scalar_lea.vmem [#allocation2], %s189
        %p191 = scmp.lt.s32.totalorder %s18, 1
        %s192 = scalar_select %p191, %s18, 1
        %s193 = smul.addr %s192, 3
        %s194 = smul.addr %s193, 8
        %s195 = scalar_lea.vmem %s0, %s194
        %v196 = vld [vmem:[%s195] sm:$0xff]
        %v197 = vld [vmem:[%s195 + $0x8] sm:$0xff]
        %v198 = vld [vmem:[%s195 + $0x10] sm:$0x3]
        %v199 = vld [vmem:[%s1] sm:$0xf]
        %s200 = scalar_lea.vmem %s1, 4
        %v201 = vld [vmem:[%s200] sm:$0xf]
        %vm205 = vcmask 1046528
        %v206 = vrot.slane %v196, 1
        %v207 = vrot.slane %v197, 1
        %v208 = vsel %vm205, %v206, %v207
        %v209 = vrot.slane %v198, 1
        %v210 = vsel %vm205, %v207, %v209
        %vm211 = vcmask 31744
        %v212 = vsel %vm211, %v208, 0
        %v214 = vsel %vm211, %v210, 0
        %vm216 = vcmask 1043456
        %v218 = vsel %vm216, %v201, 0
        %220 = vmatprep.subr.mxu0 0.0
        %221 = vmatpush1.msra.mxu0 0.0
        %222 = vmatprep.subr.mxu0 0.0
        %223 = vmatpush1.msra.mxu0 0.0
        %224 = vmatprep.subr.mxu0 0.0
        %225 = vmatpush1.msra.mxu0 0.0
        %226 = vmatprep.subr.mxu0 0.0
        %227 = vmatpush1.msra.mxu0 0.0
        %228 = vmatprep.subr.mxu0 0.0
        %229 = vmatpush1.msra.mxu0 0.0
        %230 = vmatprep.subr.mxu0 0.0
        %231 = vmatpush1.msra.mxu0 0.0
        %232 = vmatprep.subr.mxu0 0.0
        %233 = vmatpush1.msra.mxu0 0.0
        %234 = vmatprep.subr.mxu0 0.0
        %235 = vmatpush1.msra.mxu0 0.0
        %236 = vmatprep.subr.mxu0 0.0
        %237 = vmatpush1.msra.mxu0 0.0
        %238 = vmatprep.subr.mxu0 0.0
        %239 = vmatpush1.msra.mxu0 0.0
        %240 = vmatprep.subr.mxu0 0.0
        %241 = vmatpush1.msra.mxu0 0.0
        %242 = vmatprep.subr.mxu0 0.0
        %243 = vmatpush1.msra.mxu0 0.0
        %244 = vmatprep.subr.mxu0 0.0
        %245 = vmatpush1.msra.mxu0 0.0
        %246 = vmatprep.subr.mxu0 0.0
        %247 = vmatpush1.msra.mxu0 0.0
        %248 = vmatprep.subr.mxu0 0.0
        %249 = vmatpush1.msra.mxu0 0.0
        %250 = vmatprep.subr.mxu0 0.0
        %251 = vmatpush1.msra.mxu0 %v218
        %252 = vmatprep.subr.mxu0 0.0
        %253 = vmatpush2.msra.mxu0 0.0
        %254 = vmatprep.subr.mxu0 0.0
        %255 = vmatpush2.msra.mxu0 0.0
        %256 = vmatprep.subr.mxu0 0.0
        %257 = vmatpush2.msra.mxu0 0.0
        %258 = vmatprep.subr.mxu0 0.0
        %259 = vmatpush2.msra.mxu0 0.0
        %260 = vmatprep.subr.mxu0 0.0
        %261 = vmatpush2.msra.mxu0 0.0
        %262 = vmatprep.subr.mxu0 0.0
        %263 = vmatpush2.msra.mxu0 0.0
        %264 = vmatprep.subr.mxu0 0.0
        %265 = vmatpush2.msra.mxu0 0.0
        %266 = vmatprep.subr.mxu0 0.0
        %267 = vmatpush2.msra.mxu0 0.0
        %268 = vmatprep.subr.mxu0 0.0
        %269 = vmatpush2.msra.mxu0 0.0
        %270 = vmatprep.subr.mxu0 0.0
        %271 = vmatpush2.msra.mxu0 0.0
        %272 = vmatprep.subr.mxu0 0.0
        %273 = vmatpush2.msra.mxu0 0.0
        %274 = vmatprep.subr.mxu0 0.0
        %275 = vmatpush2.msra.mxu0 0.0
        %276 = vmatprep.subr.mxu0 0.0
        %277 = vmatpush2.msra.mxu0 0.0
        %278 = vmatprep.subr.mxu0 0.0
        %279 = vmatpush2.msra.mxu0 0.0
        %280 = vmatprep.subr.mxu0 0.0
        %281 = vmatpush2.msra.mxu0 0.0
        %282 = vmatprep.subr.mxu0 0.0
        %283 = vmatpush2.msra.mxu0 0.0
        %284 = vmatprep.mubr.f32.mxu0 0.0
        %285 = vmatmul.mubr.f32.gmra.mxu0 %v212
        %v286 = vpop.f32.mrf.mxu0
        %v287 = vadd.f32 0.0, %v286
        %v288 = vpop.f32.mrf.mxu0
        %289 = vmatprep.mubr.f32.mxu0 0.0
        %290 = vmatmul.mubr.f32.gmra.mxu0 %v214
        %v291 = vpop.f32.mrf.mxu0
        %v292 = vadd.f32 0.0, %v291
        %v293 = vpop.f32.mrf.mxu0
        %294 = vdwg.mxu0
        %v295 = vsel %vm211, %v196, 0
        %v297 = vsel %vm211, %v197, 0
        %v300 = vsel %vm216, %v199, 0
        %302 = vmatprep.subr.mxu0 0.0
        %303 = vmatpush1.msra.mxu0 0.0
        %304 = vmatprep.subr.mxu0 0.0
        %305 = vmatpush1.msra.mxu0 0.0
        %306 = vmatprep.subr.mxu0 0.0
        %307 = vmatpush1.msra.mxu0 0.0
        %308 = vmatprep.subr.mxu0 0.0
        %309 = vmatpush1.msra.mxu0 0.0
        %310 = vmatprep.subr.mxu0 0.0
        %311 = vmatpush1.msra.mxu0 0.0
        %312 = vmatprep.subr.mxu0 0.0
        %313 = vmatpush1.msra.mxu0 0.0
        %314 = vmatprep.subr.mxu0 0.0
        %315 = vmatpush1.msra.mxu0 0.0
        %316 = vmatprep.subr.mxu0 0.0
        %317 = vmatpush1.msra.mxu0 0.0
        %318 = vmatprep.subr.mxu0 0.0
        %319 = vmatpush1.msra.mxu0 0.0
        %320 = vmatprep.subr.mxu0 0.0
        %321 = vmatpush1.msra.mxu0 0.0
        %322 = vmatprep.subr.mxu0 0.0
        %323 = vmatpush1.msra.mxu0 0.0
        %324 = vmatprep.subr.mxu0 0.0
        %325 = vmatpush1.msra.mxu0 0.0
        %326 = vmatprep.subr.mxu0 0.0
        %327 = vmatpush1.msra.mxu0 0.0
        %328 = vmatprep.subr.mxu0 0.0
        %329 = vmatpush1.msra.mxu0 0.0
        %330 = vmatprep.subr.mxu0 0.0
        %331 = vmatpush1.msra.mxu0 0.0
        %332 = vmatprep.subr.mxu0 0.0
        %333 = vmatpush1.msra.mxu0 %v300
        %334 = vmatprep.subr.mxu0 0.0
        %335 = vmatpush2.msra.mxu0 0.0
        %336 = vmatprep.subr.mxu0 0.0
        %337 = vmatpush2.msra.mxu0 0.0
        %338 = vmatprep.subr.mxu0 0.0
        %339 = vmatpush2.msra.mxu0 0.0
        %340 = vmatprep.subr.mxu0 0.0
        %341 = vmatpush2.msra.mxu0 0.0
        %342 = vmatprep.subr.mxu0 0.0
        %343 = vmatpush2.msra.mxu0 0.0
        %344 = vmatprep.subr.mxu0 0.0
        %345 = vmatpush2.msra.mxu0 0.0
        %346 = vmatprep.subr.mxu0 0.0
        %347 = vmatpush2.msra.mxu0 0.0
        %348 = vmatprep.subr.mxu0 0.0
        %349 = vmatpush2.msra.mxu0 0.0
        %350 = vmatprep.subr.mxu0 0.0
        %351 = vmatpush2.msra.mxu0 0.0
        %352 = vmatprep.subr.mxu0 0.0
        %353 = vmatpush2.msra.mxu0 0.0
        %354 = vmatprep.subr.mxu0 0.0
        %355 = vmatpush2.msra.mxu0 0.0
        %356 = vmatprep.subr.mxu0 0.0
        %357 = vmatpush2.msra.mxu0 0.0
        %358 = vmatprep.subr.mxu0 0.0
        %359 = vmatpush2.msra.mxu0 0.0
        %360 = vmatprep.subr.mxu0 0.0
        %361 = vmatpush2.msra.mxu0 0.0
        %362 = vmatprep.subr.mxu0 0.0
        %363 = vmatpush2.msra.mxu0 0.0
        %364 = vmatprep.subr.mxu0 0.0
        %365 = vmatpush2.msra.mxu0 0.0
        %366 = vmatprep.mubr.f32.mxu0 0.0
        %367 = vmatmul.mubr.f32.gmra.mxu0 %v295
        %v368 = vpop.f32.mrf.mxu0
        %v369 = vadd.f32 %v287, %v368
        %v370 = vpop.f32.mrf.mxu0
        %371 = vmatprep.mubr.f32.mxu0 0.0
        %372 = vmatmul.mubr.f32.gmra.mxu0 %v297
        %v373 = vpop.f32.mrf.mxu0
        %v374 = vadd.f32 %v292, %v373
        %v375 = vpop.f32.mrf.mxu0
        %376 = vdwg.mxu0
        %s377 = scalar_lea.vmem %s1, 8
        %v378 = vld [vmem:[%s377] sm:$0xf]
        %vm379 = vcmask 1045504
        %v380 = vrot.slane %v196, 2
        %v381 = vrot.slane %v197, 2
        %v382 = vsel %vm379, %v380, %v381
        %v383 = vrot.slane %v198, 2
        %v384 = vsel %vm379, %v381, %v383
        %v385 = vsel %vm211, %v382, 0
        %v387 = vsel %vm211, %v384, 0
        %v390 = vsel %vm216, %v378, 0
        %392 = vmatprep.subr.mxu0 0.0
        %393 = vmatpush1.msra.mxu0 0.0
        %394 = vmatprep.subr.mxu0 0.0
        %395 = vmatpush1.msra.mxu0 0.0
        %396 = vmatprep.subr.mxu0 0.0
        %397 = vmatpush1.msra.mxu0 0.0
        %398 = vmatprep.subr.mxu0 0.0
        %399 = vmatpush1.msra.mxu0 0.0
        %400 = vmatprep.subr.mxu0 0.0
        %401 = vmatpush1.msra.mxu0 0.0
        %402 = vmatprep.subr.mxu0 0.0
        %403 = vmatpush1.msra.mxu0 0.0
        %404 = vmatprep.subr.mxu0 0.0
        %405 = vmatpush1.msra.mxu0 0.0
        %406 = vmatprep.subr.mxu0 0.0
        %407 = vmatpush1.msra.mxu0 0.0
        %408 = vmatprep.subr.mxu0 0.0
        %409 = vmatpush1.msra.mxu0 0.0
        %410 = vmatprep.subr.mxu0 0.0
        %411 = vmatpush1.msra.mxu0 0.0
        %412 = vmatprep.subr.mxu0 0.0
        %413 = vmatpush1.msra.mxu0 0.0
        %414 = vmatprep.subr.mxu0 0.0
        %415 = vmatpush1.msra.mxu0 0.0
        %416 = vmatprep.subr.mxu0 0.0
        %417 = vmatpush1.msra.mxu0 0.0
        %418 = vmatprep.subr.mxu0 0.0
        %419 = vmatpush1.msra.mxu0 0.0
        %420 = vmatprep.subr.mxu0 0.0
        %421 = vmatpush1.msra.mxu0 0.0
        %422 = vmatprep.subr.mxu0 0.0
        %423 = vmatpush1.msra.mxu0 %v390
        %424 = vmatprep.subr.mxu0 0.0
        %425 = vmatpush2.msra.mxu0 0.0
        %426 = vmatprep.subr.mxu0 0.0
        %427 = vmatpush2.msra.mxu0 0.0
        %428 = vmatprep.subr.mxu0 0.0
        %429 = vmatpush2.msra.mxu0 0.0
        %430 = vmatprep.subr.mxu0 0.0
        %431 = vmatpush2.msra.mxu0 0.0
        %432 = vmatprep.subr.mxu0 0.0
        %433 = vmatpush2.msra.mxu0 0.0
        %434 = vmatprep.subr.mxu0 0.0
        %435 = vmatpush2.msra.mxu0 0.0
        %436 = vmatprep.subr.mxu0 0.0
        %437 = vmatpush2.msra.mxu0 0.0
        %438 = vmatprep.subr.mxu0 0.0
        %439 = vmatpush2.msra.mxu0 0.0
        %440 = vmatprep.subr.mxu0 0.0
        %441 = vmatpush2.msra.mxu0 0.0
        %442 = vmatprep.subr.mxu0 0.0
        %443 = vmatpush2.msra.mxu0 0.0
        %444 = vmatprep.subr.mxu0 0.0
        %445 = vmatpush2.msra.mxu0 0.0
        %446 = vmatprep.subr.mxu0 0.0
        %447 = vmatpush2.msra.mxu0 0.0
        %448 = vmatprep.subr.mxu0 0.0
        %449 = vmatpush2.msra.mxu0 0.0
        %450 = vmatprep.subr.mxu0 0.0
        %451 = vmatpush2.msra.mxu0 0.0
        %452 = vmatprep.subr.mxu0 0.0
        %453 = vmatpush2.msra.mxu0 0.0
        %454 = vmatprep.subr.mxu0 0.0
        %455 = vmatpush2.msra.mxu0 0.0
        %456 = vmatprep.mubr.f32.mxu0 0.0
        %457 = vmatmul.mubr.f32.gmra.mxu0 %v385
        %v458 = vpop.f32.mrf.mxu0
        %v459 = vadd.f32 0.0, %v458
        %v460 = vpop.f32.mrf.mxu0
        %461 = vmatprep.mubr.f32.mxu0 0.0
        %462 = vmatmul.mubr.f32.gmra.mxu0 %v387
        %v463 = vpop.f32.mrf.mxu0
        %v464 = vadd.f32 0.0, %v463
        %v465 = vpop.f32.mrf.mxu0
        %466 = vdwg.mxu0
        %v467 = vadd.f32 %v369, %v459
        %v468 = vadd.f32 %v374, %v464
        %v469 = vld [vmem:[%s2] sm:$0x1]
        %v470 = vld [vmem:[%s2 + $0x1] sm:$0x1]
        %v471 = vld [vmem:[%s2 + $0x2] sm:$0x1]
        %vm472 = vcmask 130048
        %v473 = vsel %vm472, %v467, 0.0
        %v474 = vsel %vm472, %v468, 0.0
        %v475 = vadd.f32 %v473, %v474
        %v476 = vrot.slane %v475, 4
        %v477 = vadd.f32 %v475, %v476
        %v478 = vrot.slane %v477, 2
        %v479 = vadd.f32 %v477, %v478
        %v480 = vrot.slane %v479, 1
        %v481 = vadd.f32 %v479, %v480
        %v482 = vmul.f32 %v467, %v467
        %v483 = vmul.f32 %v468, %v468
        %v484 = vsel %vm472, %v482, 0.0
        %v485 = vsel %vm472, %v483, 0.0
        %v486 = vadd.f32 %v484, %v485
        %v487 = vrot.slane %v486, 4
        %v488 = vadd.f32 %v486, %v487
        %v489 = vrot.slane %v488, 2
        %v490 = vadd.f32 %v488, %v489
        %v491 = vrot.slane %v490, 1
        %v492 = vadd.f32 %v490, %v491
        %v493 = vmul.f32 %v469, 16.0
        %v494 = vadd.f32 %v481, %v493
        %v495 = vmul.f32 %v469, 2.0
        %v496 = vmul.f32 %v495, %v481
        %v497 = vadd.f32 %v492, %v496
        %v498 = vmul.f32 %v469, %v469
        %v499 = vmul.f32 %v498, 16.0
        %v500 = vadd.f32 %v497, %v499
        %v501 = vld [vmem:[%s3] sm:$0xff]
        %v502 = vld [vmem:[%s3 + $0x8] sm:$0xff]
        %v504 = vrot.slane %v500, 7
        %vm506 = vcmask 1040384
        %v507 = vsel %vm506, %v494, %v504
        %v509 = vsel %vm472, %v507, 0
        %511 = vmatprep.subr.mxu0 0.0
        %512 = vmatpush1.msra.mxu0 0.0
        %513 = vmatprep.subr.mxu0 0.0
        %514 = vmatpush1.msra.mxu0 0.0
        %515 = vmatprep.subr.mxu0 0.0
        %516 = vmatpush1.msra.mxu0 0.0
        %517 = vmatprep.subr.mxu0 0.0
        %518 = vmatpush1.msra.mxu0 0.0
        %519 = vmatprep.subr.mxu0 0.0
        %520 = vmatpush1.msra.mxu0 0.0
        %521 = vmatprep.subr.mxu0 0.0
        %522 = vmatpush1.msra.mxu0 0.0
        %523 = vmatprep.subr.mxu0 0.0
        %524 = vmatpush1.msra.mxu0 0.0
        %525 = vmatprep.subr.mxu0 0.0
        %526 = vmatpush1.msra.mxu0 0.0
        %527 = vmatprep.subr.mxu0 0.0
        %528 = vmatpush1.msra.mxu0 0.0
        %529 = vmatprep.subr.mxu0 0.0
        %530 = vmatpush1.msra.mxu0 0.0
        %531 = vmatprep.subr.mxu0 0.0
        %532 = vmatpush1.msra.mxu0 0.0
        %533 = vmatprep.subr.mxu0 0.0
        %534 = vmatpush1.msra.mxu0 0.0
        %535 = vmatprep.subr.mxu0 0.0
        %536 = vmatpush1.msra.mxu0 0.0
        %537 = vmatprep.subr.mxu0 0.0
        %538 = vmatpush1.msra.mxu0 0.0
        %539 = vmatprep.subr.mxu0 0.0
        %540 = vmatpush1.msra.mxu0 %v502
        %541 = vmatprep.subr.mxu0 0.0
        %542 = vmatpush1.msra.mxu0 %v501
        %543 = vmatprep.subr.mxu0 0.0
        %544 = vmatpush2.msra.mxu0 0.0
        %545 = vmatprep.subr.mxu0 0.0
        %546 = vmatpush2.msra.mxu0 0.0
        %547 = vmatprep.subr.mxu0 0.0
        %548 = vmatpush2.msra.mxu0 0.0
        %549 = vmatprep.subr.mxu0 0.0
        %550 = vmatpush2.msra.mxu0 0.0
        %551 = vmatprep.subr.mxu0 0.0
        %552 = vmatpush2.msra.mxu0 0.0
        %553 = vmatprep.subr.mxu0 0.0
        %554 = vmatpush2.msra.mxu0 0.0
        %555 = vmatprep.subr.mxu0 0.0
        %556 = vmatpush2.msra.mxu0 0.0
        %557 = vmatprep.subr.mxu0 0.0
        %558 = vmatpush2.msra.mxu0 0.0
        %559 = vmatprep.subr.mxu0 0.0
        %560 = vmatpush2.msra.mxu0 0.0
        %561 = vmatprep.subr.mxu0 0.0
        %562 = vmatpush2.msra.mxu0 0.0
        %563 = vmatprep.subr.mxu0 0.0
        %564 = vmatpush2.msra.mxu0 0.0
        %565 = vmatprep.subr.mxu0 0.0
        %566 = vmatpush2.msra.mxu0 0.0
        %567 = vmatprep.subr.mxu0 0.0
        %568 = vmatpush2.msra.mxu0 0.0
        %569 = vmatprep.subr.mxu0 0.0
        %570 = vmatpush2.msra.mxu0 0.0
        %571 = vmatprep.subr.mxu0 0.0
        %572 = vmatpush2.msra.mxu0 0.0
        %573 = vmatprep.subr.mxu0 0.0
        %574 = vmatpush2.msra.mxu0 0.0
        %575 = vmatprep.mubr.f32.mxu0 0.0
        %576 = vmatmul.mubr.f32.gmra.mxu0 %v509
        %v577 = vpop.f32.mrf.mxu0
        %v578 = vadd.f32 0.0, %v577
        %v579 = vpop.f32.mrf.mxu0
        %580 = vdwg.mxu0
        %v581 = vrcp.pop 32.0
        %v582 = vmul.f32 %v578, %v581
        %v583 = vmul.f32 %v582, %v582
        %v585 = vrot.slane %v583, 7
        %v587 = vsub.f32 %v582, %v585
        %v588 = vadd.f32 %v587, 1e-05
        %v589 = vrsqrt.pop %v588
        %v590 = vsel %vm506, %v582, %v589
        %vm591 = vcmask 64512
        %v593 = vsel %vm591, %v590, 0
        %v596 = vsel %vm591, %v501, 0
        %v599 = vsel %vm591, %v502, 0
        %601 = vmatprep.subr.mxu0 0.0
        %602 = vmatpush1.xpose.msra.mxu0 0.0
        %603 = vmatprep.subr.mxu0 0.0
        %604 = vmatpush1.xpose.msra.mxu0 0.0
        %605 = vmatprep.subr.mxu0 0.0
        %606 = vmatpush1.xpose.msra.mxu0 0.0
        %607 = vmatprep.subr.mxu0 0.0
        %608 = vmatpush1.xpose.msra.mxu0 0.0
        %609 = vmatprep.subr.mxu0 0.0
        %610 = vmatpush1.xpose.msra.mxu0 0.0
        %611 = vmatprep.subr.mxu0 0.0
        %612 = vmatpush1.xpose.msra.mxu0 0.0
        %613 = vmatprep.subr.mxu0 0.0
        %614 = vmatpush1.xpose.msra.mxu0 0.0
        %615 = vmatprep.subr.mxu0 0.0
        %616 = vmatpush1.xpose.msra.mxu0 0.0
        %617 = vmatprep.subr.mxu0 0.0
        %618 = vmatpush1.xpose.msra.mxu0 0.0
        %619 = vmatprep.subr.mxu0 0.0
        %620 = vmatpush1.xpose.msra.mxu0 0.0
        %621 = vmatprep.subr.mxu0 0.0
        %622 = vmatpush1.xpose.msra.mxu0 0.0
        %623 = vmatprep.subr.mxu0 0.0
        %624 = vmatpush1.xpose.msra.mxu0 0.0
        %625 = vmatprep.subr.mxu0 0.0
        %626 = vmatpush1.xpose.msra.mxu0 0.0
        %627 = vmatprep.subr.mxu0 0.0
        %628 = vmatpush1.xpose.msra.mxu0 0.0
        %629 = vmatprep.subr.mxu0 0.0
        %630 = vmatpush1.xpose.msra.mxu0 %v599
        %631 = vmatprep.subr.mxu0 0.0
        %632 = vmatpush1.xpose.msra.mxu0 %v596
        %633 = vmatprep.subr.mxu0 0.0
        %634 = vmatpush2.xpose.msra.mxu0 0.0
        %635 = vmatprep.subr.mxu0 0.0
        %636 = vmatpush2.xpose.msra.mxu0 0.0
        %637 = vmatprep.subr.mxu0 0.0
        %638 = vmatpush2.xpose.msra.mxu0 0.0
        %639 = vmatprep.subr.mxu0 0.0
        %640 = vmatpush2.xpose.msra.mxu0 0.0
        %641 = vmatprep.subr.mxu0 0.0
        %642 = vmatpush2.xpose.msra.mxu0 0.0
        %643 = vmatprep.subr.mxu0 0.0
        %644 = vmatpush2.xpose.msra.mxu0 0.0
        %645 = vmatprep.subr.mxu0 0.0
        %646 = vmatpush2.xpose.msra.mxu0 0.0
        %647 = vmatprep.subr.mxu0 0.0
        %648 = vmatpush2.xpose.msra.mxu0 0.0
        %649 = vmatprep.subr.mxu0 0.0
        %650 = vmatpush2.xpose.msra.mxu0 0.0
        %651 = vmatprep.subr.mxu0 0.0
        %652 = vmatpush2.xpose.msra.mxu0 0.0
        %653 = vmatprep.subr.mxu0 0.0
        %654 = vmatpush2.xpose.msra.mxu0 0.0
        %655 = vmatprep.subr.mxu0 0.0
        %656 = vmatpush2.xpose.msra.mxu0 0.0
        %657 = vmatprep.subr.mxu0 0.0
        %658 = vmatpush2.xpose.msra.mxu0 0.0
        %659 = vmatprep.subr.mxu0 0.0
        %660 = vmatpush2.xpose.msra.mxu0 0.0
        %661 = vmatprep.subr.mxu0 0.0
        %662 = vmatpush2.xpose.msra.mxu0 0.0
        %663 = vmatprep.subr.mxu0 0.0
        %664 = vmatpush2.xpose.msra.mxu0 0.0
        %665 = vmatprep.mubr.f32.mxu0 0.0
        %666 = vmatmul.mubr.f32.gmra.mxu0 %v593
        %v667 = vpop.f32.mrf.mxu0
        %v668 = vadd.f32 0.0, %v667
        %v669 = vpop.f32.mrf.mxu0
        %670 = vdwg.mxu0
        %v672 = vrot.slane %v470, 7
        %v674 = vmul.f32 %v668, %v672
        %v675 = vsub.f32 %v469, %v668
        %v677 = vrot.slane %v674, 1
        %v679 = vmul.f32 %v675, %v677
        %v680 = vadd.f32 %v471, %v679
        %v681 = vlaneseq
        %v682 = vshrl.u32 %v681, 7
        %v683 = vsub.s32 1, %v682
        %v684 = vrot.slane %v674, %v683
        %v685 = vmul.f32 %v467, %v684
        %v686 = vmul.f32 %v468, %v684
        %v687 = vlaneseq
        %v688 = vshrl.u32 %v687, 7
        %v689 = vsub.s32 0, %v688
        %v690 = vrot.slane %v680, %v689
        %v691 = vadd.f32 %v685, %v690
        %v692 = vadd.f32 %v686, %v690
        %v693 = vmin.f32 %v691, 20.0
        %v694 = vmin.f32 %v692, 20.0
        %v695 = vmul.f32 %v693, 1.442695
        %v696 = vpow.pop %v695
        %v697 = vmul.f32 %v694, 1.442695
        %v698 = vpow.pop %v697
        %v699 = vadd.f32 %v696, 2.0
        %v700 = vadd.f32 %v698, 2.0
        %v701 = vmul.f32 %v696, %v699
        %v702 = vmul.f32 %v698, %v700
        %v703 = vmul.f32 %v691, %v701
        %v704 = vmul.f32 %v692, %v702
        %v705 = vadd.f32 %v701, 2.0
        %v706 = vadd.f32 %v702, 2.0
        %v707 = vrcp.pop %v705
        %v708 = vrcp.pop %v706
        %v709 = vmul.f32 %v703, %v707
        %v710 = vmul.f32 %v704, %v708
        %711 = vst.msk [vmem:[%s190] sm:$0xff] %vm472, %v709
        %712 = vst.msk [vmem:[%s190 + $0x8] sm:$0xff] %vm472, %v710
        %s713 = sand.u32 %s115, 1
        %s714 = scalar_lea.sflag [#allocation3], %s713
        %s715 = sand.u32 %s115, 1
        %s716 = smul.addr %s715, 16
        %s717 = scalar_lea.vmem [#allocation2], %s716
        // Predicated region
        $region37: #{tpu_custom_call.1} parent=35 // pred_check
          %p718 = pneg %p125
        $region38: #{tpu_custom_call.1} parent=35 // pred_check_branch
          %720 = sbr.rel (%p718) target = $region40
        $region39: #{tpu_custom_call.1} parent=35 // pred_region
          %s722 = ssub.s32 256, 256
          %723 = vsyncadd %s714, %s722
          %s724 = smul.addr %s18, 2
          %s725 = smul.addr %s724, 128
          %s726 = scalar_lea.hbm %s4, %s725
          %s727 = sshll.u32 %s717, 4
          %s728 = int_to_ptr.vmem [resolvable:$true] %s727
          %733 = dma.vmem_to_hbm [thread:$0]  %s728, 256, %s726, %s714, 128, 128, 8
        $region40: #{tpu_custom_call.1} parent=35 // pred_fallthru
          _
      $region36: #{tpu_custom_call.1} parent=5 // pred_fallthru
        _
      %p734 = scmp.le.s32.totalorder 2, %s13
      // Predicated region
      $region41: #{tpu_custom_call.1} parent=5 // pred_check
        %p735 = pneg %p734
      $region42: #{tpu_custom_call.1} parent=5 // pred_check_branch
        %737 = sbr.rel (%p735) target = $region44
      $region43: #{tpu_custom_call.1} parent=5 // pred_region
        %s738 = ssub.s32 %s13, 2
        // Predicated region
        $region45: #{tpu_custom_call.1} parent=43 // pred_check
          %p739 = pneg %p131
        $region46: #{tpu_custom_call.1} parent=43 // pred_check_branch
          %741 = sbr.rel (%p739) target = $region48
        $region47: #{tpu_custom_call.1} parent=43 // pred_region
          %s742 = sand.u32 %s116, 1
          %s743 = scalar_lea.sflag [#allocation3], %s742
          %s744 = sand.u32 %s116, 1
          %s745 = smul.addr %s744, 16
          %s746 = scalar_lea.vmem [#allocation2], %s745
          %747 = dma.done %s743, 256
        $region48: #{tpu_custom_call.1} parent=43 // pred_fallthru
          _
      $region44: #{tpu_custom_call.1} parent=5 // pred_fallthru
        _
    $region6: #{tpu_custom_call.1} parent=1 // loop_footer
      %s17 = sadd.s32 1, %s13
    $region7: #{tpu_custom_call.1} parent=1 // loop_footer_branch
      %12 = sbr.rel target = $region3
    $region8: #{tpu_custom_call.1} parent=1 // loop_exit
      _
    %748 = vsyncpa [#allocation3], 1
    %s749 = scalar_lea.sflag [#allocation3], 1
    %750 = vsyncpa %s749, 1

</llo_original>
